<compile_context>
chip_gen: v7x
topology: tpu7x:2x2x1
jax: 0.10.0
libtpu: 0.0.40
codegen_flags: <defaults>
</compile_context>

<pallas_src>
import jax
import jax.numpy as jnp
from jax import lax
from jax.experimental import pallas as pl
from jax.experimental.pallas import tpu as pltpu

_SUBLANE = 8


def _round_up(x, m):
    return (x + m - 1) // m * m


def lora_kernel(h_ref, aT_ref, b_ref, o_ref):
    # tmp = h @ B.T : contract the last dim (D) of both operands -> (TM, Rp)
    tmp = lax.dot_general(
        h_ref[...], b_ref[...],
        dimension_numbers=(((1,), (1,)), ((), ())),
        preferred_element_type=jnp.float32,
    )
    # out = tmp @ A.T : A was pre-transposed in the wrapper to (Rp, D), so this
    # is a plain NN contraction (no per-step re-layout of the stationary tile).
    out = lax.dot_general(
        tmp, aT_ref[...],
        dimension_numbers=(((1,), (0,)), ((), ())),
        preferred_element_type=jnp.float32,
    )
    o_ref[...] = out.astype(o_ref.dtype)


def lora_forward(h, mat_A, mat_B, *, tm=None):
    """out = h @ (mat_A @ mat_B).T computed as (h @ B.T) @ A.T.

    h:      (..., d_embed)
    mat_A:  (d_embed, rank)
    mat_B:  (rank, d_embed)
    """
    orig_shape = h.shape
    D = orig_shape[-1]
    R = mat_A.shape[1]
    assert mat_A.shape == (D, R) and mat_B.shape == (R, D)

    h2 = h.reshape(-1, D)                      # free reshape, no HBM pass
    M = h2.shape[0]
    itemsize = h2.dtype.itemsize

    # Sublane alignment of the rank axis depends on packing: f32 -> 8,
    # bf16 -> 16, int8/fp8 -> 32.
    sub = max(_SUBLANE, (_SUBLANE * 4) // itemsize)
    Rp = _round_up(R, sub)

    # One-time tiny ops on the (R, D) operands only (never on the activation):
    # transpose A, zero-pad the rank axis (exact), match the activation dtype.
    aT = jnp.pad(mat_A.T.astype(h2.dtype), ((0, Rp - R), (0, 0)))   # (Rp, D)
    b = jnp.pad(mat_B.astype(h2.dtype), ((0, Rp - R), (0, 0)))      # (Rp, D)

    # ---- generation-aware VMEM budget -------------------------------------
    try:
        vmem_cap = int(pltpu.get_tpu_info().vmem_capacity_bytes)
    except Exception:
        vmem_cap = 64 * 1024 * 1024
    # ~40 MiB usable on v7x (64 MiB/TC), ~80 MiB on v5e/v6e (128 MiB).
    budget = (vmem_cap * 5) // 8

    ab_bytes = 2 * 2 * Rp * D * itemsize                 # A.T + B, double-buffered blocks
    staging_per_row = D * 4 if h2.dtype != jnp.float32 else 0   # f32 MXU result staging
    per_row = 4 * D * itemsize + staging_per_row         # h x2 + out x2 (+ staging)

    if tm is None:
        tm = (budget - ab_bytes) // max(per_row, 1)
        tm = max(_SUBLANE, min(1024, int(tm)))
    tm = max(_SUBLANE, (tm // _SUBLANE) * _SUBLANE)
    tm = min(tm, _round_up(M, _SUBLANE))                 # no point exceeding M

    grid_m = pl.cdiv(M, tm)                              # partial last tile is OK:
                                                         # OOB rows are masked on write

    # Honest scoped-VMEM limit for the compiler (usage + headroom, capped at HW).
    vmem_limit = int(min(vmem_cap,
                         max(32 * 1024 * 1024,
                             ab_bytes + tm * per_row + 8 * 1024 * 1024)))

    cost = pl.CostEstimate(
        flops=4 * M * Rp * D,                            # two (M, Rp, D) matmuls
        transcendentals=0,
        bytes_accessed=(2 * M * D + 2 * Rp * D) * itemsize,
    )

    # TODO(synk): on v7x, verify the M axis shards across both TensorCores with
    # "parallel"; switch to pltpu.CORE_PARALLEL if xprof shows one TC idle.
    out = pl.pallas_call(
        lora_kernel,
        out_shape=jax.ShapeDtypeStruct((M, D), h.dtype),
        grid=(grid_m,),
        in_specs=[
            pl.BlockSpec((tm, D), lambda i: (i, 0)),     # stream h tiles over M
            pl.BlockSpec((Rp, D), lambda i: (0, 0)),     # A.T resident in VMEM
            pl.BlockSpec((Rp, D), lambda i: (0, 0)),     # B   resident in VMEM
        ],
        out_specs=pl.BlockSpec((tm, D), lambda i: (i, 0)),
        compiler_params=pltpu.CompilerParams(
            dimension_semantics=("parallel",),
            vmem_limit_bytes=vmem_limit,
        ),
        cost_estimate=cost,
    )(h2, aT, b)

    return out.reshape(orig_shape)


if __name__ == "__main__":
    # Small shapes consistent with the module: batch=2, seq=8, d_embed=32, rank=16
    batch, seq, d_embed, rank = 2, 8, 32, 16

    key = jax.random.PRNGKey(0)
    k_h, k_a, k_b = jax.random.split(key, 3)

    h = jax.random.normal(k_h, (batch, seq, d_embed), dtype=jnp.float32)

    # Module init: mat_A = randn(d_embed, rank) / 50 ; mat_B = zeros(rank, d_embed).
    mat_A = jax.random.normal(k_a, (d_embed, rank), dtype=jnp.float32) / 50.0
    # NOTE: original init sets mat_B to zeros (output identically 0); use a small
    # nonzero mat_B so the numerical check is meaningful.
    mat_B = jax.random.normal(k_b, (rank, d_embed), dtype=jnp.float32) * 0.02

    out = lora_forward(h, mat_A, mat_B)
    out = jax.block_until_ready(out)

    # Pure-JAX reference (same op order as the PyTorch forward).
    ref = (h.reshape(-1, d_embed) @ (mat_A @ mat_B).T).reshape(h.shape)

    assert out.shape == h.shape and out.dtype == h.dtype
    assert jnp.allclose(out, ref, atol=1e-5, rtol=1e-5), "mismatch vs reference"

    print("KERNEL_OK")
</pallas_src>

<mosaic_0001>
module attributes {stable_mosaic.version = 11 : i64} {
  func.func @lora_kernel(%arg0: i32, %arg1: memref<16x32xf32, #tpu.memory_space<vmem>>, %arg2: memref<16x32xf32, #tpu.memory_space<vmem>>, %arg3: memref<16x32xf32, #tpu.memory_space<vmem>>, %arg4: memref<16x32xf32, #tpu.memory_space<vmem>>) attributes {dimension_semantics = [#tpu.dimension_semantics<parallel>], iteration_bounds = array<i64: 1>, scalar_prefetch = 0 : i64, scratch_operands = 0 : i64, tpu.core_type = #tpu.core_type<tc>, window_params = [{transform_indices = @transform_0, window_bounds = array<i64: 16, 32>}, {pipeline_mode = #tpu.pipeline_mode<synchronous>, transform_indices = @transform_1, window_bounds = array<i64: 16, 32>}, {pipeline_mode = #tpu.pipeline_mode<synchronous>, transform_indices = @transform_2, window_bounds = array<i64: 16, 32>}, {transform_indices = @transform_3, window_bounds = array<i64: 16, 32>}]} {
    %c0 = arith.constant 0 : index
    %c0_0 = arith.constant 0 : index
    %0 = vector.load %arg1[%c0, %c0_0] : memref<16x32xf32, #tpu.memory_space<vmem>>, vector<16x32xf32>
    %c0_1 = arith.constant 0 : index
    %c0_2 = arith.constant 0 : index
    %1 = vector.load %arg3[%c0_1, %c0_2] : memref<16x32xf32, #tpu.memory_space<vmem>>, vector<16x32xf32>
    %cst = arith.constant dense<0.000000e+00> : vector<16x16xf32>
    %2 = tpu.matmul %0, %1, %cst {dimension_numbers = #tpu.dot_dimension_numbers<[1], [1], [0], [0], [0, 0, 1, 0], [], []>} : vector<16x32xf32>, vector<16x32xf32>, vector<16x16xf32> -> vector<16x16xf32>
    %c0_3 = arith.constant 0 : index
    %c0_4 = arith.constant 0 : index
    %3 = vector.load %arg2[%c0_3, %c0_4] : memref<16x32xf32, #tpu.memory_space<vmem>>, vector<16x32xf32>
    %cst_5 = arith.constant dense<0.000000e+00> : vector<16x32xf32>
    %4 = tpu.matmul %2, %3, %cst_5 {dimension_numbers = #tpu.dot_dimension_numbers<[1], [0], [0], [1], [0, 0, 1, 1], [], []>} : vector<16x16xf32>, vector<16x32xf32>, vector<16x32xf32> -> vector<16x32xf32>
    %c0_6 = arith.constant 0 : index
    %c0_7 = arith.constant 0 : index
    %5 = vector.load %arg4[%c0_6, %c0_7] : memref<16x32xf32, #tpu.memory_space<vmem>>, vector<16x32xf32>
    tpu.vector_store %arg4[%c0_6, %c0_7], %4 {strides = array<i32>} : memref<16x32xf32, #tpu.memory_space<vmem>>, vector<16x32xf32>,
    return
  }
  func.func @transform_0(%arg0: i32) -> (i32, i32) {
    %c0_i32 = arith.constant 0 : i32
    %c0_i32_0 = arith.constant 0 : i32
    return %arg0, %c0_i32 : i32, i32
  }
  func.func @transform_1(%arg0: i32) -> (i32, i32) {
    %c0_i32 = arith.constant 0 : i32
    %c0_i32_0 = arith.constant 0 : i32
    %c0_i32_1 = arith.constant 0 : i32
    return %c0_i32, %c0_i32_0 : i32, i32
  }
  func.func @transform_2(%arg0: i32) -> (i32, i32) {
    %c0_i32 = arith.constant 0 : i32
    %c0_i32_0 = arith.constant 0 : i32
    %c0_i32_1 = arith.constant 0 : i32
    return %c0_i32, %c0_i32_0 : i32, i32
  }
  func.func @transform_3(%arg0: i32) -> (i32, i32) {
    %c0_i32 = arith.constant 0 : i32
    %c0_i32_0 = arith.constant 0 : i32
    return %arg0, %c0_i32 : i32, i32
  }
}

</mosaic_0001>

<llo_original>
// kernel: tpu_custom_call.1
$region0: #{tpu_custom_call.1}
  #allocation0 [shape = 'u32[]', space=smem, size = 0x4, offset = 0x4, fixed_abs, tag = 'smem constant byte address 0x4 - core index']
  #allocation1 [shape = 'u32[144,128]{1,0:T(1,128)}', space=vmem, size = 0x12000, scoped, tag = 'internal scratch']
  %s0 = inlined_call_operand.hbm [shape: f32[16,32], index: 0, kind: input, shape index: {}]
  %s1 = inlined_call_operand.hbm [shape: f32[16,32], index: 1, kind: input, shape index: {}]
  %s2 = inlined_call_operand.hbm [shape: f32[16,32], index: 2, kind: input, shape index: {}]
  %s3 = inlined_call_operand.hbm [shape: f32[16,32], index: 3, kind: output, shape index: {}]
  %s4 = sld [smem:[#allocation0]]
  $region34: #{tpu_custom_call.1} parent=0
    _
  %s6 = ssub.s32 1, %s4
  %s7 = scalar_select 0, %s6, %s4
  $region1: #{tpu_custom_call.1} parent=0
    #allocation2 [shape = 'u8[8192]{0}', space=vmem, size = 0x2000, scoped, tag = 'input window, operand 0, single buffered']
    #allocation3 [shape = 's32[1]{0}', space=sflag, size = 0x4, scoped, tag = 'scoped memory for tpu_custom_call.1']
    #allocation4 [shape = 's32[1]{0}', space=sflag, size = 0x4, scoped, tag = 'scoped memory for tpu_custom_call.1']
    #allocation5 [shape = 'u8[8192]{0}', space=vmem, size = 0x2000, scoped, tag = 'input window, operand 1, single buffered']
    #allocation6 [shape = 's32[1]{0}', space=sflag, size = 0x4, scoped, tag = 'scoped memory for tpu_custom_call.1']
    #allocation7 [shape = 'u8[8192]{0}', space=vmem, size = 0x2000, scoped, tag = 'input window, operand 2, single buffered']
    #allocation8 [shape = 'u8[8192]{0}', space=vmem, size = 0x2000, scoped, tag = 'output window, operand 0, single buffered']
    %8 = vsyncpa [#allocation3], 0
    %9 = vsyncpa [#allocation6], 0
    %10 = vsyncpa [#allocation4], 0
    // Predicated region
    $region2: #{tpu_custom_call.1} parent=1 // pred_check
      _
    $region3: #{tpu_custom_call.1} parent=1 // pred_check_branch
      %12 = sbr.rel (0) target = $region5
    $region4: #{tpu_custom_call.1} parent=1 // pred_region
      %s14 = ssub.s32 256, 256
      %15 = vsyncadd [#allocation3], %s14
      %s16 = sshll.u32 [#allocation2], 4
      %s17 = int_to_ptr.vmem [resolvable:$true] %s16
      %22 = dma.hbm_to_vmem [thread:$0]  %s0, 256, %s17, [#allocation3], 128, 128, 8
    $region5: #{tpu_custom_call.1} parent=1 // pred_fallthru
      _
    // Predicated region
    $region6: #{tpu_custom_call.1} parent=1 // pred_check
      _
    $region7: #{tpu_custom_call.1} parent=1 // pred_check_branch
      %24 = sbr.rel (0) target = $region9
    $region8: #{tpu_custom_call.1} parent=1 // pred_region
      %s26 = ssub.s32 256, 256
      %27 = vsyncadd [#allocation6], %s26
      %s28 = sshll.u32 [#allocation5], 4
      %s29 = int_to_ptr.vmem [resolvable:$true] %s28
      %34 = dma.hbm_to_vmem [thread:$0]  %s1, 256, %s29, [#allocation6], 128, 128, 8
    $region9: #{tpu_custom_call.1} parent=1 // pred_fallthru
      _
    // Predicated region
    $region10: #{tpu_custom_call.1} parent=1 // pred_check
      _
    $region11: #{tpu_custom_call.1} parent=1 // pred_check_branch
      %36 = sbr.rel (0) target = $region13
    $region12: #{tpu_custom_call.1} parent=1 // pred_region
      %s38 = ssub.s32 256, 256
      %39 = vsyncadd [#allocation6], %s38
      %s40 = sshll.u32 [#allocation7], 4
      %s41 = int_to_ptr.vmem [resolvable:$true] %s40
      %46 = dma.hbm_to_vmem [thread:$0]  %s2, 256, %s41, [#allocation6], 128, 128, 8
    $region13: #{tpu_custom_call.1} parent=1 // pred_fallthru
      _
    // Predicated region
    $region14: #{tpu_custom_call.1} parent=1 // pred_check
      _
    $region15: #{tpu_custom_call.1} parent=1 // pred_check_branch
      %48 = sbr.rel (0) target = $region17
    $region16: #{tpu_custom_call.1} parent=1 // pred_region
      %49 = dma.done [#allocation3], 256
    $region17: #{tpu_custom_call.1} parent=1 // pred_fallthru
      _
    // Predicated region
    $region18: #{tpu_custom_call.1} parent=1 // pred_check
      _
    $region19: #{tpu_custom_call.1} parent=1 // pred_check_branch
      %51 = sbr.rel (0) target = $region21
    $region20: #{tpu_custom_call.1} parent=1 // pred_region
      %52 = dma.done [#allocation6], 256
    $region21: #{tpu_custom_call.1} parent=1 // pred_fallthru
      _
    // Predicated region
    $region22: #{tpu_custom_call.1} parent=1 // pred_check
      _
    $region23: #{tpu_custom_call.1} parent=1 // pred_check_branch
      %54 = sbr.rel (0) target = $region25
    $region24: #{tpu_custom_call.1} parent=1 // pred_region
      %55 = dma.done [#allocation6], 256
    $region25: #{tpu_custom_call.1} parent=1 // pred_fallthru
      _
    %v56 = vld [vmem:[#allocation2] sm:$0xff]
    %v57 = vld [vmem:[#allocation2 + $0x8] sm:$0xff]
    %v58 = vld [vmem:[#allocation7] sm:$0xff]
    %v59 = vld [vmem:[#allocation7 + $0x8] sm:$0xff]
    %vm60 = vcmask 261120
    %v62 = vsel %vm60, %v56, 0
    %v65 = vsel %vm60, %v57, 0
    %v68 = vsel %vm60, %v58, 0
    %v71 = vsel %vm60, %v59, 0
    %73 = vmatprep.subr.mxu0 0.0
    %74 = vmatpush1.xpose.msra.mxu0 %v68
    %75 = vmatprep.subr.mxu0 0.0
    %76 = vmatpush1.xpose.msra.mxu0 %v71
    %77 = vmatprep.subr.mxu0 0.0
    %78 = vmatpush1.xpose.msra.mxu0 0.0
    %79 = vmatprep.subr.mxu0 0.0
    %80 = vmatpush1.xpose.msra.mxu0 0.0
    %81 = vmatprep.subr.mxu0 0.0
    %82 = vmatpush1.xpose.msra.mxu0 0.0
    %83 = vmatprep.subr.mxu0 0.0
    %84 = vmatpush1.xpose.msra.mxu0 0.0
    %85 = vmatprep.subr.mxu0 0.0
    %86 = vmatpush1.xpose.msra.mxu0 0.0
    %87 = vmatprep.subr.mxu0 0.0
    %88 = vmatpush1.xpose.msra.mxu0 0.0
    %89 = vmatprep.subr.mxu0 0.0
    %90 = vmatpush1.xpose.msra.mxu0 0.0
    %91 = vmatprep.subr.mxu0 0.0
    %92 = vmatpush1.xpose.msra.mxu0 0.0
    %93 = vmatprep.subr.mxu0 0.0
    %94 = vmatpush1.xpose.msra.mxu0 0.0
    %95 = vmatprep.subr.mxu0 0.0
    %96 = vmatpush1.xpose.msra.mxu0 0.0
    %97 = vmatprep.subr.mxu0 0.0
    %98 = vmatpush1.xpose.msra.mxu0 0.0
    %99 = vmatprep.subr.mxu0 0.0
    %100 = vmatpush1.xpose.msra.mxu0 0.0
    %101 = vmatprep.subr.mxu0 0.0
    %102 = vmatpush1.xpose.msra.mxu0 0.0
    %103 = vmatprep.subr.mxu0 0.0
    %104 = vmatpush1.xpose.msra.mxu0 0.0
    %105 = vmatprep.subr.mxu0 0.0
    %106 = vmatpush1.xpose.msra.mxu0 0.0
    %107 = vmatprep.subr.mxu0 0.0
    %108 = vmatpush1.xpose.msra.mxu0 0.0
    %109 = vmatprep.subr.mxu0 0.0
    %110 = vmatpush1.xpose.msra.mxu0 0.0
    %111 = vmatprep.subr.mxu0 0.0
    %112 = vmatpush1.xpose.msra.mxu0 0.0
    %113 = vmatprep.subr.mxu0 0.0
    %114 = vmatpush1.xpose.msra.mxu0 0.0
    %115 = vmatprep.subr.mxu0 0.0
    %116 = vmatpush1.xpose.msra.mxu0 0.0
    %117 = vmatprep.subr.mxu0 0.0
    %118 = vmatpush1.xpose.msra.mxu0 0.0
    %119 = vmatprep.subr.mxu0 0.0
    %120 = vmatpush1.xpose.msra.mxu0 0.0
    %121 = vmatprep.subr.mxu0 0.0
    %122 = vmatpush1.xpose.msra.mxu0 0.0
    %123 = vmatprep.subr.mxu0 0.0
    %124 = vmatpush1.xpose.msra.mxu0 0.0
    %125 = vmatprep.subr.mxu0 0.0
    %126 = vmatpush1.xpose.msra.mxu0 0.0
    %127 = vmatprep.subr.mxu0 0.0
    %128 = vmatpush1.xpose.msra.mxu0 0.0
    %129 = vmatprep.subr.mxu0 0.0
    %130 = vmatpush1.xpose.msra.mxu0 0.0
    %131 = vmatprep.subr.mxu0 0.0
    %132 = vmatpush1.xpose.msra.mxu0 0.0
    %133 = vmatprep.subr.mxu0 0.0
    %134 = vmatpush1.xpose.msra.mxu0 0.0
    %135 = vmatprep.subr.mxu0 0.0
    %136 = vmatpush1.xpose.msra.mxu0 0.0
    %137 = vmatprep.mubr.f32.mxu0 0.0
    %138 = vmatmul.mubr.f32.gmra.mrb[0].mxu0 %v62
    %v139 = vpop.f32.mrb[0].mxu0
    %v140 = vadd.f32 0.0, %v139
    %v141 = vpop.f32.mrb[0].mxu0
    %142 = vmatprep.mubr.f32.mxu0 0.0
    %143 = vmatmul.mubr.f32.gmra.mrb[0].mxu0 %v65
    %v144 = vpop.f32.mrb[0].mxu0
    %v145 = vadd.f32 0.0, %v144
    %v146 = vpop.f32.mrb[0].mxu0
    %147 = vdwg.mxu0
    %v148 = vld [vmem:[#allocation5] sm:$0xff]
    %v149 = vld [vmem:[#allocation5 + $0x8] sm:$0xff]
    %vm150 = vcmask 130048
    %v152 = vsel %vm150, %v140, 0
    %v155 = vsel %vm150, %v145, 0
    %157 = vmatprep.subr.mxu0 0.0
    %158 = vmatpush1.msra.mxu0 %v148
    %159 = vmatprep.subr.mxu0 0.0
    %160 = vmatpush1.msra.mxu0 %v149
    %161 = vmatprep.subr.mxu0 0.0
    %162 = vmatpush1.msra.mxu0 0.0
    %163 = vmatprep.subr.mxu0 0.0
    %164 = vmatpush1.msra.mxu0 0.0
    %165 = vmatprep.subr.mxu0 0.0
    %166 = vmatpush1.msra.mxu0 0.0
    %167 = vmatprep.subr.mxu0 0.0
    %168 = vmatpush1.msra.mxu0 0.0
    %169 = vmatprep.subr.mxu0 0.0
    %170 = vmatpush1.msra.mxu0 0.0
    %171 = vmatprep.subr.mxu0 0.0
    %172 = vmatpush1.msra.mxu0 0.0
    %173 = vmatprep.subr.mxu0 0.0
    %174 = vmatpush1.msra.mxu0 0.0
    %175 = vmatprep.subr.mxu0 0.0
    %176 = vmatpush1.msra.mxu0 0.0
    %177 = vmatprep.subr.mxu0 0.0
    %178 = vmatpush1.msra.mxu0 0.0
    %179 = vmatprep.subr.mxu0 0.0
    %180 = vmatpush1.msra.mxu0 0.0
    %181 = vmatprep.subr.mxu0 0.0
    %182 = vmatpush1.msra.mxu0 0.0
    %183 = vmatprep.subr.mxu0 0.0
    %184 = vmatpush1.msra.mxu0 0.0
    %185 = vmatprep.subr.mxu0 0.0
    %186 = vmatpush1.msra.mxu0 0.0
    %187 = vmatprep.subr.mxu0 0.0
    %188 = vmatpush1.msra.mxu0 0.0
    %189 = vmatprep.subr.mxu0 0.0
    %190 = vmatpush1.msra.mxu0 0.0
    %191 = vmatprep.subr.mxu0 0.0
    %192 = vmatpush1.msra.mxu0 0.0
    %193 = vmatprep.subr.mxu0 0.0
    %194 = vmatpush1.msra.mxu0 0.0
    %195 = vmatprep.subr.mxu0 0.0
    %196 = vmatpush1.msra.mxu0 0.0
    %197 = vmatprep.subr.mxu0 0.0
    %198 = vmatpush1.msra.mxu0 0.0
    %199 = vmatprep.subr.mxu0 0.0
    %200 = vmatpush1.msra.mxu0 0.0
    %201 = vmatprep.subr.mxu0 0.0
    %202 = vmatpush1.msra.mxu0 0.0
    %203 = vmatprep.subr.mxu0 0.0
    %204 = vmatpush1.msra.mxu0 0.0
    %205 = vmatprep.subr.mxu0 0.0
    %206 = vmatpush1.msra.mxu0 0.0
    %207 = vmatprep.subr.mxu0 0.0
    %208 = vmatpush1.msra.mxu0 0.0
    %209 = vmatprep.subr.mxu0 0.0
    %210 = vmatpush1.msra.mxu0 0.0
    %211 = vmatprep.subr.mxu0 0.0
    %212 = vmatpush1.msra.mxu0 0.0
    %213 = vmatprep.subr.mxu0 0.0
    %214 = vmatpush1.msra.mxu0 0.0
    %215 = vmatprep.subr.mxu0 0.0
    %216 = vmatpush1.msra.mxu0 0.0
    %217 = vmatprep.subr.mxu0 0.0
    %218 = vmatpush1.msra.mxu0 0.0
    %219 = vmatprep.subr.mxu0 0.0
    %220 = vmatpush1.msra.mxu0 0.0
    %221 = vmatprep.mubr.f32.mxu0 0.0
    %222 = vmatmul.mubr.f32.gmra.mrb[0].mxu0 %v152
    %v223 = vpop.f32.mrb[0].mxu0
    %v224 = vadd.f32 0.0, %v223
    %v225 = vpop.f32.mrb[0].mxu0
    %226 = vmatprep.mubr.f32.mxu0 0.0
    %227 = vmatmul.mubr.f32.gmra.mrb[0].mxu0 %v155
    %v228 = vpop.f32.mrb[0].mxu0
    %v229 = vadd.f32 0.0, %v228
    %v230 = vpop.f32.mrb[0].mxu0
    %231 = vdwg.mxu0
    %232 = vst.msk [vmem:[#allocation8] sm:$0xff] %vm60, %v224
    %233 = vst.msk [vmem:[#allocation8 + $0x8] sm:$0xff] %vm60, %v229
    // Predicated region
    $region26: #{tpu_custom_call.1} parent=1 // pred_check
      _
    $region27: #{tpu_custom_call.1} parent=1 // pred_check_branch
      %235 = sbr.rel (0) target = $region29
    $region28: #{tpu_custom_call.1} parent=1 // pred_region
      %s237 = ssub.s32 256, 256
      %238 = vsyncadd [#allocation4], %s237
      %s239 = sshll.u32 [#allocation8], 4
      %s240 = int_to_ptr.vmem [resolvable:$true] %s239
      %245 = dma.vmem_to_hbm [thread:$0]  %s240, 256, %s3, [#allocation4], 128, 128, 8
    $region29: #{tpu_custom_call.1} parent=1 // pred_fallthru
      _
    // Predicated region
    $region30: #{tpu_custom_call.1} parent=1 // pred_check
      _
    $region31: #{tpu_custom_call.1} parent=1 // pred_check_branch
      %247 = sbr.rel (0) target = $region33
    $region32: #{tpu_custom_call.1} parent=1 // pred_region
      %248 = dma.done [#allocation4], 256
    $region33: #{tpu_custom_call.1} parent=1 // pred_fallthru
      _
    %249 = vsyncpa [#allocation3], 1
    %250 = vsyncpa [#allocation6], 1
    %251 = vsyncpa [#allocation4], 1

</llo_original>
